<compile_context>
chip_gen: v5e
topology: v5e:2x2
jax: 0.10.0
libtpu: 0.0.40
codegen_flags: <defaults>
</compile_context>

<pallas_src>
import jax
import jax.numpy as jnp
from jax.experimental import pallas as pl
from jax.experimental.pallas import tpu as pltpu  # noqa: F401  (kept for parity)


# ---------------------------------------------------------------------------
# Pallas kernel: full sequence in one invocation
# ---------------------------------------------------------------------------
def gru_decoder_kernel(
    emb_ref,    # (T, Bp, I)  bf16  embedded inputs, batch padded to Bp
    h0_ref,     # (Bp, H)     f32   initial hidden state
    wih_ref,    # (I, 3H)     bf16  fused W_ih^T, gate order (r, z, n)
    whh_ref,    # (H, 3H)     bf16  fused W_hh^T, gate order (r, z, n)
    bi_ref,     # (1, 3H)     f32   [b_ih_r+b_hh_r | b_ih_z+b_hh_z | b_ih_n]
    bhn_ref,    # (1, H)      f32   b_hh_n  (must stay behind the r* multiply)
    wdec_ref,   # (H, O)      bf16  decoder weight^T
    bdec_ref,   # (1, O)      f32   decoder bias
    out_ref,    # (T, Bp, O)  f32   logits
    hout_ref,   # (Bp, H)     f32   final hidden state
):
    T, Bp, I = emb_ref.shape
    H = h0_ref.shape[1]
    O = out_ref.shape[2]

    # ---- input gates: hoisted out of the serial chain, ONE tall fused matmul.
    x = emb_ref[...].reshape(T * Bp, I)                       # bf16
    gi = (jnp.dot(x, wih_ref[...], preferred_element_type=jnp.float32)
          + bi_ref[...]).reshape(T, Bp, 3 * H)                # f32 (T, Bp, 3H)
    gi_rz = gi[:, :, :2 * H]                                  # (T, Bp, 2H)
    gi_n = gi[:, :, 2 * H:]                                   # (T, Bp, H)

    whh = whh_ref[...]                                        # loop-invariant RHS
    bh_n = jnp.broadcast_to(bhn_ref[...], (Bp, H))            # hoisted broadcast

    # ---- serial GRU recurrence, fully unrolled (T static & small).
    #      One fused (Bp,H)x(H,3H) MXU op per step; gate extraction = static
    #      lane slices; r/z share one sigmoid; everything elementwise in f32.
    h = h0_ref[...]                                           # f32 (Bp, H)
    hs_list = []
    for t in range(T):
        gh = jnp.dot(h.astype(jnp.bfloat16), whh,
                     preferred_element_type=jnp.float32)      # f32 (Bp, 3H)
        rz = jax.nn.sigmoid(gi_rz[t] + gh[:, :2 * H])         # (Bp, 2H)
        r = rz[:, :H]
        z = rz[:, H:]
        n = jnp.tanh(gi_n[t] + r * (gh[:, 2 * H:] + bh_n))
        h = (1.0 - z) * n + z * h
        hs_list.append(h)

    hout_ref[...] = h

    # ---- decoder: hidden states stay in vregs; one fused matmul over (T*Bp, H).
    hs = jnp.concatenate(hs_list, axis=0)                     # f32 (T*Bp, H)
    logits = (jnp.dot(hs.astype(jnp.bfloat16), wdec_ref[...],
                      preferred_element_type=jnp.float32)
              + bdec_ref[...])                                # f32 (T*Bp, O)
    out_ref[...] = logits.reshape(T, Bp, O)


# ---------------------------------------------------------------------------
# Wrapper
# ---------------------------------------------------------------------------
def rnn_forward(input_seq, hidden_state, params):
    """input_seq: int32 (T, B); hidden_state: f32 (1, B, H)."""
    emb_table = params["embedding"]        # (V, I)  with I == V
    w_ih_t = params["w_ih_t"]              # (I, 3H) gate order (r, z, n)
    w_hh_t = params["w_hh_t"]              # (H, 3H)
    b_ih = params["b_ih"]                  # (1, 3H)
    b_hh = params["b_hh"]                  # (1, 3H)
    w_dec_t = params["w_dec_t"]            # (H, O)
    b_dec = params["b_dec"]                # (1, O)

    T, B = input_seq.shape
    H = w_hh_t.shape[0]
    O = w_dec_t.shape[1]

    # glue: embedding lookup (pure gather) — kept outside the kernel.
    emb = jnp.take(emb_table, input_seq, axis=0)   # (T, B, I)
    h0 = hidden_state[0]                           # (B, H)

    # pad batch to a multiple of 8 sublanes (tile-aligned reshapes in-kernel).
    Bp = max(8, ((B + 7) // 8) * 8)
    if Bp != B:
        emb = jnp.pad(emb, ((0, 0), (0, Bp - B), (0, 0)))
        h0 = jnp.pad(h0, ((0, Bp - B), (0, 0)))

    # fold b_hh_r / b_hh_z into the precomputed input-gate biases (valid: r,z
    # just sum gi+gh); b_hh_n stays separate (behind r* in PyTorch GRU).
    bi = jnp.concatenate(
        [b_ih[:, :2 * H] + b_hh[:, :2 * H], b_ih[:, 2 * H:]], axis=1)  # (1, 3H)
    bh_n = b_hh[:, 2 * H:]                                             # (1, H)

    # matmul OPERANDS in bf16 (single-pass MXU on all gens); accumulation and
    # all elementwise / transcendental math remain f32 inside the kernel.
    emb_bf = emb.astype(jnp.bfloat16)
    wih_bf = w_ih_t.astype(jnp.bfloat16)
    whh_bf = w_hh_t.astype(jnp.bfloat16)
    wdec_bf = w_dec_t.astype(jnp.bfloat16)

    logits_p, h_n_p = pl.pallas_call(
        gru_decoder_kernel,
        out_shape=(
            jax.ShapeDtypeStruct((T, Bp, O), jnp.float32),
            jax.ShapeDtypeStruct((Bp, H), jnp.float32),
        ),
    )(emb_bf, h0, wih_bf, whh_bf, bi, bh_n, wdec_bf, b_dec)

    logits = logits_p[:, :B, :]
    h_n = h_n_p[:B]
    return logits, h_n[None]   # hidden_state returned as (1, B, H)


# ---------------------------------------------------------------------------
# Pure-JAX f32 reference (PyTorch GRU semantics) for verification
# ---------------------------------------------------------------------------
def rnn_forward_ref(input_seq, hidden_state, params):
    emb = jnp.take(params["embedding"], input_seq, axis=0)   # (T, B, I)
    H = params["w_hh_t"].shape[0]
    h = hidden_state[0]

    def step(h, x):
        gi = x @ params["w_ih_t"] + params["b_ih"]
        gh = h @ params["w_hh_t"] + params["b_hh"]
        i_r, i_z, i_n = gi[:, :H], gi[:, H:2 * H], gi[:, 2 * H:]
        h_r, h_z, h_n = gh[:, :H], gh[:, H:2 * H], gh[:, 2 * H:]
        r = jax.nn.sigmoid(i_r + h_r)
        z = jax.nn.sigmoid(i_z + h_z)
        n = jnp.tanh(i_n + r * h_n)
        h_new = (1.0 - z) * n + z * h
        return h_new, h_new

    h_n, hs = jax.lax.scan(step, h, emb)
    logits = hs @ params["w_dec_t"] + params["b_dec"]
    return logits, h_n[None]


# ---------------------------------------------------------------------------
if __name__ == "__main__":
    # small synthetic sizes consistent with the module:
    # NUM_LETTERS (vocab == input_size == output_size) = 32, hidden = 32,
    # seq_len = 8, batch = 2, num_layers = 1, rnn_type = 'gru'
    VOCAB, HIDDEN, SEQ, BATCH = 32, 32, 8, 2

    key = jax.random.PRNGKey(0)
    ks = jax.random.split(key, 9)
    scale = 1.0 / jnp.sqrt(jnp.float32(HIDDEN))

    params = {
        "embedding": jax.random.normal(ks[0], (VOCAB, VOCAB), jnp.float32),
        # PyTorch stores weight_ih_l0 as (3H, I); we keep the transpose for x @ W^T.
        "w_ih_t": jax.random.uniform(ks[1], (VOCAB, 3 * HIDDEN), jnp.float32,
                                     -scale, scale),
        "w_hh_t": jax.random.uniform(ks[2], (HIDDEN, 3 * HIDDEN), jnp.float32,
                                     -scale, scale),
        "b_ih": jax.random.uniform(ks[3], (1, 3 * HIDDEN), jnp.float32, -scale, scale),
        "b_hh": jax.random.uniform(ks[4], (1, 3 * HIDDEN), jnp.float32, -scale, scale),
        "w_dec_t": jax.random.uniform(ks[5], (HIDDEN, VOCAB), jnp.float32,
                                      -scale, scale),
        "b_dec": jax.random.uniform(ks[6], (1, VOCAB), jnp.float32, -scale, scale),
    }

    input_seq = jax.random.randint(ks[7], (SEQ, BATCH), 0, VOCAB, jnp.int32)
    hidden_state = jax.random.normal(ks[8], (1, BATCH, HIDDEN), jnp.float32)

    logits, h_n = jax.jit(rnn_forward)(input_seq, hidden_state, params)
    jax.block_until_ready((logits, h_n))

    # verify against the pure-f32 reference. Tolerances are loosened because the
    # MXU operands are bf16 (rounding compounds over the T-step recurrence); the
    # carried h, f32 accumulation, and all gate math stay f32 to bound the error.
    logits_ref, h_n_ref = rnn_forward_ref(input_seq, hidden_state, params)
    assert logits.shape == (SEQ, BATCH, VOCAB)
    assert h_n.shape == (1, BATCH, HIDDEN)
    assert jnp.allclose(logits, logits_ref, atol=1e-1, rtol=5e-2)
    assert jnp.allclose(h_n, h_n_ref, atol=1e-1, rtol=5e-2)

    print("KERNEL_OK")
</pallas_src>

<mosaic_0001>
module attributes {stable_mosaic.version = 11 : i64} {
  func.func @gru_decoder_kernel(%arg0: memref<8x8x32xbf16, #tpu.memory_space<vmem>>, %arg1: memref<8x32xf32, #tpu.memory_space<vmem>>, %arg2: memref<32x96xbf16, #tpu.memory_space<vmem>>, %arg3: memref<32x96xbf16, #tpu.memory_space<vmem>>, %arg4: memref<1x96xf32, #tpu.memory_space<vmem>>, %arg5: memref<1x32xf32, #tpu.memory_space<vmem>>, %arg6: memref<32x32xbf16, #tpu.memory_space<vmem>>, %arg7: memref<1x32xf32, #tpu.memory_space<vmem>>, %arg8: memref<8x8x32xf32, #tpu.memory_space<vmem>>, %arg9: memref<8x32xf32, #tpu.memory_space<vmem>>) attributes {dimension_semantics = [], scalar_prefetch = 0 : i64, scratch_operands = 0 : i64, tpu.core_type = #tpu.core_type<tc>} {
    %c0 = arith.constant 0 : index
    %c0_0 = arith.constant 0 : index
    %c0_1 = arith.constant 0 : index
    %0 = vector.load %arg0[%c0, %c0_0, %c0_1] : memref<8x8x32xbf16, #tpu.memory_space<vmem>>, vector<8x8x32xbf16>
    %1 = vector.shape_cast %0 : vector<8x8x32xbf16> to vector<64x32xbf16>
    %c0_2 = arith.constant 0 : index
    %c0_3 = arith.constant 0 : index
    %2 = vector.load %arg2[%c0_2, %c0_3] : memref<32x96xbf16, #tpu.memory_space<vmem>>, vector<32x96xbf16>
    %cst = arith.constant dense<0.000000e+00> : vector<64x96xf32>
    %3 = tpu.matmul %1, %2, %cst {dimension_numbers = #tpu.dot_dimension_numbers<[1], [0], [0], [1], [0, 0, 1, 1], [], []>} : vector<64x32xbf16>, vector<32x96xbf16>, vector<64x96xf32> -> vector<64x96xf32>
    %c0_4 = arith.constant 0 : index
    %c0_5 = arith.constant 0 : index
    %4 = vector.load %arg4[%c0_4, %c0_5] : memref<1x96xf32, #tpu.memory_space<vmem>>, vector<1x96xf32>
    %5 = vector.broadcast %4 : vector<1x96xf32> to vector<64x96xf32>
    %6 = arith.addf %3, %5 : vector<64x96xf32>
    %7 = vector.shape_cast %6 : vector<64x96xf32> to vector<8x8x96xf32>
    %8 = vector.extract_strided_slice %7 {offsets = [0, 0, 0], sizes = [8, 8, 64], strides = [1, 1, 1]} : vector<8x8x96xf32> to vector<8x8x64xf32>
    %9 = vector.extract_strided_slice %7 {offsets = [0, 0, 64], sizes = [8, 8, 32], strides = [1, 1, 1]} : vector<8x8x96xf32> to vector<8x8x32xf32>
    %c0_6 = arith.constant 0 : index
    %c0_7 = arith.constant 0 : index
    %10 = vector.load %arg3[%c0_6, %c0_7] : memref<32x96xbf16, #tpu.memory_space<vmem>>, vector<32x96xbf16>
    %c0_8 = arith.constant 0 : index
    %c0_9 = arith.constant 0 : index
    %11 = vector.load %arg5[%c0_8, %c0_9] : memref<1x32xf32, #tpu.memory_space<vmem>>, vector<1x32xf32>
    %12 = vector.shape_cast %11 : vector<1x32xf32> to vector<1x32xf32>
    %13 = vector.broadcast %12 : vector<1x32xf32> to vector<8x32xf32>
    %c0_10 = arith.constant 0 : index
    %c0_11 = arith.constant 0 : index
    %14 = vector.load %arg1[%c0_10, %c0_11] : memref<8x32xf32, #tpu.memory_space<vmem>>, vector<8x32xf32>
    %15 = arith.truncf %14 : vector<8x32xf32> to vector<8x32xbf16>
    %cst_12 = arith.constant dense<0.000000e+00> : vector<8x96xf32>
    %16 = tpu.matmul %15, %10, %cst_12 {dimension_numbers = #tpu.dot_dimension_numbers<[1], [0], [0], [1], [0, 0, 1, 1], [], []>} : vector<8x32xbf16>, vector<32x96xbf16>, vector<8x96xf32> -> vector<8x96xf32>
    %17 = vector.extract_strided_slice %8 {offsets = [0, 0, 0], sizes = [1, 8, 64], strides = [1, 1, 1]} : vector<8x8x64xf32> to vector<1x8x64xf32>
    %18 = vector.shape_cast %17 : vector<1x8x64xf32> to vector<8x64xf32>
    %19 = vector.extract_strided_slice %16 {offsets = [0, 0], sizes = [8, 64], strides = [1, 1]} : vector<8x96xf32> to vector<8x64xf32>
    %20 = arith.addf %18, %19 : vector<8x64xf32>
    %21 = arith.negf %20 : vector<8x64xf32>
    %22 = math.exp %21 : vector<8x64xf32>
    %cst_13 = arith.constant 1.000000e+00 : f32
    %23 = vector.broadcast %cst_13 : f32 to vector<8x64xf32>
    %24 = arith.addf %23, %22 : vector<8x64xf32>
    %25 = arith.divf %23, %24 : vector<8x64xf32>
    %26 = vector.extract_strided_slice %25 {offsets = [0, 0], sizes = [8, 32], strides = [1, 1]} : vector<8x64xf32> to vector<8x32xf32>
    %27 = vector.extract_strided_slice %25 {offsets = [0, 32], sizes = [8, 32], strides = [1, 1]} : vector<8x64xf32> to vector<8x32xf32>
    %28 = vector.extract_strided_slice %9 {offsets = [0, 0, 0], sizes = [1, 8, 32], strides = [1, 1, 1]} : vector<8x8x32xf32> to vector<1x8x32xf32>
    %29 = vector.shape_cast %28 : vector<1x8x32xf32> to vector<8x32xf32>
    %30 = vector.extract_strided_slice %16 {offsets = [0, 64], sizes = [8, 32], strides = [1, 1]} : vector<8x96xf32> to vector<8x32xf32>
    %31 = arith.addf %30, %13 : vector<8x32xf32>
    %32 = arith.mulf %26, %31 : vector<8x32xf32>
    %33 = arith.addf %29, %32 : vector<8x32xf32>
    %34 = math.tanh %33 : vector<8x32xf32>
    %cst_14 = arith.constant 1.000000e+00 : f32
    %35 = vector.broadcast %cst_14 : f32 to vector<8x32xf32>
    %36 = arith.subf %35, %27 : vector<8x32xf32>
    %37 = arith.mulf %36, %34 : vector<8x32xf32>
    %38 = arith.mulf %27, %14 : vector<8x32xf32>
    %39 = arith.addf %37, %38 : vector<8x32xf32>
    %40 = arith.truncf %39 : vector<8x32xf32> to vector<8x32xbf16>
    %cst_15 = arith.constant dense<0.000000e+00> : vector<8x96xf32>
    %41 = tpu.matmul %40, %10, %cst_15 {dimension_numbers = #tpu.dot_dimension_numbers<[1], [0], [0], [1], [0, 0, 1, 1], [], []>} : vector<8x32xbf16>, vector<32x96xbf16>, vector<8x96xf32> -> vector<8x96xf32>
    %42 = vector.extract_strided_slice %8 {offsets = [1, 0, 0], sizes = [1, 8, 64], strides = [1, 1, 1]} : vector<8x8x64xf32> to vector<1x8x64xf32>
    %43 = vector.shape_cast %42 : vector<1x8x64xf32> to vector<8x64xf32>
    %44 = vector.extract_strided_slice %41 {offsets = [0, 0], sizes = [8, 64], strides = [1, 1]} : vector<8x96xf32> to vector<8x64xf32>
    %45 = arith.addf %43, %44 : vector<8x64xf32>
    %46 = arith.negf %45 : vector<8x64xf32>
    %47 = math.exp %46 : vector<8x64xf32>
    %cst_16 = arith.constant 1.000000e+00 : f32
    %48 = vector.broadcast %cst_16 : f32 to vector<8x64xf32>
    %49 = arith.addf %48, %47 : vector<8x64xf32>
    %50 = arith.divf %48, %49 : vector<8x64xf32>
    %51 = vector.extract_strided_slice %50 {offsets = [0, 0], sizes = [8, 32], strides = [1, 1]} : vector<8x64xf32> to vector<8x32xf32>
    %52 = vector.extract_strided_slice %50 {offsets = [0, 32], sizes = [8, 32], strides = [1, 1]} : vector<8x64xf32> to vector<8x32xf32>
    %53 = vector.extract_strided_slice %9 {offsets = [1, 0, 0], sizes = [1, 8, 32], strides = [1, 1, 1]} : vector<8x8x32xf32> to vector<1x8x32xf32>
    %54 = vector.shape_cast %53 : vector<1x8x32xf32> to vector<8x32xf32>
    %55 = vector.extract_strided_slice %41 {offsets = [0, 64], sizes = [8, 32], strides = [1, 1]} : vector<8x96xf32> to vector<8x32xf32>
    %56 = arith.addf %55, %13 : vector<8x32xf32>
    %57 = arith.mulf %51, %56 : vector<8x32xf32>
    %58 = arith.addf %54, %57 : vector<8x32xf32>
    %59 = math.tanh %58 : vector<8x32xf32>
    %cst_17 = arith.constant 1.000000e+00 : f32
    %60 = vector.broadcast %cst_17 : f32 to vector<8x32xf32>
    %61 = arith.subf %60, %52 : vector<8x32xf32>
    %62 = arith.mulf %61, %59 : vector<8x32xf32>
    %63 = arith.mulf %52, %39 : vector<8x32xf32>
    %64 = arith.addf %62, %63 : vector<8x32xf32>
    %65 = arith.truncf %64 : vector<8x32xf32> to vector<8x32xbf16>
    %cst_18 = arith.constant dense<0.000000e+00> : vector<8x96xf32>
    %66 = tpu.matmul %65, %10, %cst_18 {dimension_numbers = #tpu.dot_dimension_numbers<[1], [0], [0], [1], [0, 0, 1, 1], [], []>} : vector<8x32xbf16>, vector<32x96xbf16>, vector<8x96xf32> -> vector<8x96xf32>
    %67 = vector.extract_strided_slice %8 {offsets = [2, 0, 0], sizes = [1, 8, 64], strides = [1, 1, 1]} : vector<8x8x64xf32> to vector<1x8x64xf32>
    %68 = vector.shape_cast %67 : vector<1x8x64xf32> to vector<8x64xf32>
    %69 = vector.extract_strided_slice %66 {offsets = [0, 0], sizes = [8, 64], strides = [1, 1]} : vector<8x96xf32> to vector<8x64xf32>
    %70 = arith.addf %68, %69 : vector<8x64xf32>
    %71 = arith.negf %70 : vector<8x64xf32>
    %72 = math.exp %71 : vector<8x64xf32>
    %cst_19 = arith.constant 1.000000e+00 : f32
    %73 = vector.broadcast %cst_19 : f32 to vector<8x64xf32>
    %74 = arith.addf %73, %72 : vector<8x64xf32>
    %75 = arith.divf %73, %74 : vector<8x64xf32>
    %76 = vector.extract_strided_slice %75 {offsets = [0, 0], sizes = [8, 32], strides = [1, 1]} : vector<8x64xf32> to vector<8x32xf32>
    %77 = vector.extract_strided_slice %75 {offsets = [0, 32], sizes = [8, 32], strides = [1, 1]} : vector<8x64xf32> to vector<8x32xf32>
    %78 = vector.extract_strided_slice %9 {offsets = [2, 0, 0], sizes = [1, 8, 32], strides = [1, 1, 1]} : vector<8x8x32xf32> to vector<1x8x32xf32>
    %79 = vector.shape_cast %78 : vector<1x8x32xf32> to vector<8x32xf32>
    %80 = vector.extract_strided_slice %66 {offsets = [0, 64], sizes = [8, 32], strides = [1, 1]} : vector<8x96xf32> to vector<8x32xf32>
    %81 = arith.addf %80, %13 : vector<8x32xf32>
    %82 = arith.mulf %76, %81 : vector<8x32xf32>
    %83 = arith.addf %79, %82 : vector<8x32xf32>
    %84 = math.tanh %83 : vector<8x32xf32>
    %cst_20 = arith.constant 1.000000e+00 : f32
    %85 = vector.broadcast %cst_20 : f32 to vector<8x32xf32>
    %86 = arith.subf %85, %77 : vector<8x32xf32>
    %87 = arith.mulf %86, %84 : vector<8x32xf32>
    %88 = arith.mulf %77, %64 : vector<8x32xf32>
    %89 = arith.addf %87, %88 : vector<8x32xf32>
    %90 = arith.truncf %89 : vector<8x32xf32> to vector<8x32xbf16>
    %cst_21 = arith.constant dense<0.000000e+00> : vector<8x96xf32>
    %91 = tpu.matmul %90, %10, %cst_21 {dimension_numbers = #tpu.dot_dimension_numbers<[1], [0], [0], [1], [0, 0, 1, 1], [], []>} : vector<8x32xbf16>, vector<32x96xbf16>, vector<8x96xf32> -> vector<8x96xf32>
    %92 = vector.extract_strided_slice %8 {offsets = [3, 0, 0], sizes = [1, 8, 64], strides = [1, 1, 1]} : vector<8x8x64xf32> to vector<1x8x64xf32>
    %93 = vector.shape_cast %92 : vector<1x8x64xf32> to vector<8x64xf32>
    %94 = vector.extract_strided_slice %91 {offsets = [0, 0], sizes = [8, 64], strides = [1, 1]} : vector<8x96xf32> to vector<8x64xf32>
    %95 = arith.addf %93, %94 : vector<8x64xf32>
    %96 = arith.negf %95 : vector<8x64xf32>
    %97 = math.exp %96 : vector<8x64xf32>
    %cst_22 = arith.constant 1.000000e+00 : f32
    %98 = vector.broadcast %cst_22 : f32 to vector<8x64xf32>
    %99 = arith.addf %98, %97 : vector<8x64xf32>
    %100 = arith.divf %98, %99 : vector<8x64xf32>
    %101 = vector.extract_strided_slice %100 {offsets = [0, 0], sizes = [8, 32], strides = [1, 1]} : vector<8x64xf32> to vector<8x32xf32>
    %102 = vector.extract_strided_slice %100 {offsets = [0, 32], sizes = [8, 32], strides = [1, 1]} : vector<8x64xf32> to vector<8x32xf32>
    %103 = vector.extract_strided_slice %9 {offsets = [3, 0, 0], sizes = [1, 8, 32], strides = [1, 1, 1]} : vector<8x8x32xf32> to vector<1x8x32xf32>
    %104 = vector.shape_cast %103 : vector<1x8x32xf32> to vector<8x32xf32>
    %105 = vector.extract_strided_slice %91 {offsets = [0, 64], sizes = [8, 32], strides = [1, 1]} : vector<8x96xf32> to vector<8x32xf32>
    %106 = arith.addf %105, %13 : vector<8x32xf32>
    %107 = arith.mulf %101, %106 : vector<8x32xf32>
    %108 = arith.addf %104, %107 : vector<8x32xf32>
    %109 = math.tanh %108 : vector<8x32xf32>
    %cst_23 = arith.constant 1.000000e+00 : f32
    %110 = vector.broadcast %cst_23 : f32 to vector<8x32xf32>
    %111 = arith.subf %110, %102 : vector<8x32xf32>
    %112 = arith.mulf %111, %109 : vector<8x32xf32>
    %113 = arith.mulf %102, %89 : vector<8x32xf32>
    %114 = arith.addf %112, %113 : vector<8x32xf32>
    %115 = arith.truncf %114 : vector<8x32xf32> to vector<8x32xbf16>
    %cst_24 = arith.constant dense<0.000000e+00> : vector<8x96xf32>
    %116 = tpu.matmul %115, %10, %cst_24 {dimension_numbers = #tpu.dot_dimension_numbers<[1], [0], [0], [1], [0, 0, 1, 1], [], []>} : vector<8x32xbf16>, vector<32x96xbf16>, vector<8x96xf32> -> vector<8x96xf32>
    %117 = vector.extract_strided_slice %8 {offsets = [4, 0, 0], sizes = [1, 8, 64], strides = [1, 1, 1]} : vector<8x8x64xf32> to vector<1x8x64xf32>
    %118 = vector.shape_cast %117 : vector<1x8x64xf32> to vector<8x64xf32>
    %119 = vector.extract_strided_slice %116 {offsets = [0, 0], sizes = [8, 64], strides = [1, 1]} : vector<8x96xf32> to vector<8x64xf32>
    %120 = arith.addf %118, %119 : vector<8x64xf32>
    %121 = arith.negf %120 : vector<8x64xf32>
    %122 = math.exp %121 : vector<8x64xf32>
    %cst_25 = arith.constant 1.000000e+00 : f32
    %123 = vector.broadcast %cst_25 : f32 to vector<8x64xf32>
    %124 = arith.addf %123, %122 : vector<8x64xf32>
    %125 = arith.divf %123, %124 : vector<8x64xf32>
    %126 = vector.extract_strided_slice %125 {offsets = [0, 0], sizes = [8, 32], strides = [1, 1]} : vector<8x64xf32> to vector<8x32xf32>
    %127 = vector.extract_strided_slice %125 {offsets = [0, 32], sizes = [8, 32], strides = [1, 1]} : vector<8x64xf32> to vector<8x32xf32>
    %128 = vector.extract_strided_slice %9 {offsets = [4, 0, 0], sizes = [1, 8, 32], strides = [1, 1, 1]} : vector<8x8x32xf32> to vector<1x8x32xf32>
    %129 = vector.shape_cast %128 : vector<1x8x32xf32> to vector<8x32xf32>
    %130 = vector.extract_strided_slice %116 {offsets = [0, 64], sizes = [8, 32], strides = [1, 1]} : vector<8x96xf32> to vector<8x32xf32>
    %131 = arith.addf %130, %13 : vector<8x32xf32>
    %132 = arith.mulf %126, %131 : vector<8x32xf32>
    %133 = arith.addf %129, %132 : vector<8x32xf32>
    %134 = math.tanh %133 : vector<8x32xf32>
    %cst_26 = arith.constant 1.000000e+00 : f32
    %135 = vector.broadcast %cst_26 : f32 to vector<8x32xf32>
    %136 = arith.subf %135, %127 : vector<8x32xf32>
    %137 = arith.mulf %136, %134 : vector<8x32xf32>
    %138 = arith.mulf %127, %114 : vector<8x32xf32>
    %139 = arith.addf %137, %138 : vector<8x32xf32>
    %140 = arith.truncf %139 : vector<8x32xf32> to vector<8x32xbf16>
    %cst_27 = arith.constant dense<0.000000e+00> : vector<8x96xf32>
    %141 = tpu.matmul %140, %10, %cst_27 {dimension_numbers = #tpu.dot_dimension_numbers<[1], [0], [0], [1], [0, 0, 1, 1], [], []>} : vector<8x32xbf16>, vector<32x96xbf16>, vector<8x96xf32> -> vector<8x96xf32>
    %142 = vector.extract_strided_slice %8 {offsets = [5, 0, 0], sizes = [1, 8, 64], strides = [1, 1, 1]} : vector<8x8x64xf32> to vector<1x8x64xf32>
    %143 = vector.shape_cast %142 : vector<1x8x64xf32> to vector<8x64xf32>
    %144 = vector.extract_strided_slice %141 {offsets = [0, 0], sizes = [8, 64], strides = [1, 1]} : vector<8x96xf32> to vector<8x64xf32>
    %145 = arith.addf %143, %144 : vector<8x64xf32>
    %146 = arith.negf %145 : vector<8x64xf32>
    %147 = math.exp %146 : vector<8x64xf32>
    %cst_28 = arith.constant 1.000000e+00 : f32
    %148 = vector.broadcast %cst_28 : f32 to vector<8x64xf32>
    %149 = arith.addf %148, %147 : vector<8x64xf32>
    %150 = arith.divf %148, %149 : vector<8x64xf32>
    %151 = vector.extract_strided_slice %150 {offsets = [0, 0], sizes = [8, 32], strides = [1, 1]} : vector<8x64xf32> to vector<8x32xf32>
    %152 = vector.extract_strided_slice %150 {offsets = [0, 32], sizes = [8, 32], strides = [1, 1]} : vector<8x64xf32> to vector<8x32xf32>
    %153 = vector.extract_strided_slice %9 {offsets = [5, 0, 0], sizes = [1, 8, 32], strides = [1, 1, 1]} : vector<8x8x32xf32> to vector<1x8x32xf32>
    %154 = vector.shape_cast %153 : vector<1x8x32xf32> to vector<8x32xf32>
    %155 = vector.extract_strided_slice %141 {offsets = [0, 64], sizes = [8, 32], strides = [1, 1]} : vector<8x96xf32> to vector<8x32xf32>
    %156 = arith.addf %155, %13 : vector<8x32xf32>
    %157 = arith.mulf %151, %156 : vector<8x32xf32>
    %158 = arith.addf %154, %157 : vector<8x32xf32>
    %159 = math.tanh %158 : vector<8x32xf32>
    %cst_29 = arith.constant 1.000000e+00 : f32
    %160 = vector.broadcast %cst_29 : f32 to vector<8x32xf32>
    %161 = arith.subf %160, %152 : vector<8x32xf32>
    %162 = arith.mulf %161, %159 : vector<8x32xf32>
    %163 = arith.mulf %152, %139 : vector<8x32xf32>
    %164 = arith.addf %162, %163 : vector<8x32xf32>
    %165 = arith.truncf %164 : vector<8x32xf32> to vector<8x32xbf16>
    %cst_30 = arith.constant dense<0.000000e+00> : vector<8x96xf32>
    %166 = tpu.matmul %165, %10, %cst_30 {dimension_numbers = #tpu.dot_dimension_numbers<[1], [0], [0], [1], [0, 0, 1, 1], [], []>} : vector<8x32xbf16>, vector<32x96xbf16>, vector<8x96xf32> -> vector<8x96xf32>
    %167 = vector.extract_strided_slice %8 {offsets = [6, 0, 0], sizes = [1, 8, 64], strides = [1, 1, 1]} : vector<8x8x64xf32> to vector<1x8x64xf32>
    %168 = vector.shape_cast %167 : vector<1x8x64xf32> to vector<8x64xf32>
    %169 = vector.extract_strided_slice %166 {offsets = [0, 0], sizes = [8, 64], strides = [1, 1]} : vector<8x96xf32> to vector<8x64xf32>
    %170 = arith.addf %168, %169 : vector<8x64xf32>
    %171 = arith.negf %170 : vector<8x64xf32>
    %172 = math.exp %171 : vector<8x64xf32>
    %cst_31 = arith.constant 1.000000e+00 : f32
    %173 = vector.broadcast %cst_31 : f32 to vector<8x64xf32>
    %174 = arith.addf %173, %172 : vector<8x64xf32>
    %175 = arith.divf %173, %174 : vector<8x64xf32>
    %176 = vector.extract_strided_slice %175 {offsets = [0, 0], sizes = [8, 32], strides = [1, 1]} : vector<8x64xf32> to vector<8x32xf32>
    %177 = vector.extract_strided_slice %175 {offsets = [0, 32], sizes = [8, 32], strides = [1, 1]} : vector<8x64xf32> to vector<8x32xf32>
    %178 = vector.extract_strided_slice %9 {offsets = [6, 0, 0], sizes = [1, 8, 32], strides = [1, 1, 1]} : vector<8x8x32xf32> to vector<1x8x32xf32>
    %179 = vector.shape_cast %178 : vector<1x8x32xf32> to vector<8x32xf32>
    %180 = vector.extract_strided_slice %166 {offsets = [0, 64], sizes = [8, 32], strides = [1, 1]} : vector<8x96xf32> to vector<8x32xf32>
    %181 = arith.addf %180, %13 : vector<8x32xf32>
    %182 = arith.mulf %176, %181 : vector<8x32xf32>
    %183 = arith.addf %179, %182 : vector<8x32xf32>
    %184 = math.tanh %183 : vector<8x32xf32>
    %cst_32 = arith.constant 1.000000e+00 : f32
    %185 = vector.broadcast %cst_32 : f32 to vector<8x32xf32>
    %186 = arith.subf %185, %177 : vector<8x32xf32>
    %187 = arith.mulf %186, %184 : vector<8x32xf32>
    %188 = arith.mulf %177, %164 : vector<8x32xf32>
    %189 = arith.addf %187, %188 : vector<8x32xf32>
    %190 = arith.truncf %189 : vector<8x32xf32> to vector<8x32xbf16>
    %cst_33 = arith.constant dense<0.000000e+00> : vector<8x96xf32>
    %191 = tpu.matmul %190, %10, %cst_33 {dimension_numbers = #tpu.dot_dimension_numbers<[1], [0], [0], [1], [0, 0, 1, 1], [], []>} : vector<8x32xbf16>, vector<32x96xbf16>, vector<8x96xf32> -> vector<8x96xf32>
    %192 = vector.extract_strided_slice %8 {offsets = [7, 0, 0], sizes = [1, 8, 64], strides = [1, 1, 1]} : vector<8x8x64xf32> to vector<1x8x64xf32>
    %193 = vector.shape_cast %192 : vector<1x8x64xf32> to vector<8x64xf32>
    %194 = vector.extract_strided_slice %191 {offsets = [0, 0], sizes = [8, 64], strides = [1, 1]} : vector<8x96xf32> to vector<8x64xf32>
    %195 = arith.addf %193, %194 : vector<8x64xf32>
    %196 = arith.negf %195 : vector<8x64xf32>
    %197 = math.exp %196 : vector<8x64xf32>
    %cst_34 = arith.constant 1.000000e+00 : f32
    %198 = vector.broadcast %cst_34 : f32 to vector<8x64xf32>
    %199 = arith.addf %198, %197 : vector<8x64xf32>
    %200 = arith.divf %198, %199 : vector<8x64xf32>
    %201 = vector.extract_strided_slice %200 {offsets = [0, 0], sizes = [8, 32], strides = [1, 1]} : vector<8x64xf32> to vector<8x32xf32>
    %202 = vector.extract_strided_slice %200 {offsets = [0, 32], sizes = [8, 32], strides = [1, 1]} : vector<8x64xf32> to vector<8x32xf32>
    %203 = vector.extract_strided_slice %9 {offsets = [7, 0, 0], sizes = [1, 8, 32], strides = [1, 1, 1]} : vector<8x8x32xf32> to vector<1x8x32xf32>
    %204 = vector.shape_cast %203 : vector<1x8x32xf32> to vector<8x32xf32>
    %205 = vector.extract_strided_slice %191 {offsets = [0, 64], sizes = [8, 32], strides = [1, 1]} : vector<8x96xf32> to vector<8x32xf32>
    %206 = arith.addf %205, %13 : vector<8x32xf32>
    %207 = arith.mulf %201, %206 : vector<8x32xf32>
    %208 = arith.addf %204, %207 : vector<8x32xf32>
    %209 = math.tanh %208 : vector<8x32xf32>
    %cst_35 = arith.constant 1.000000e+00 : f32
    %210 = vector.broadcast %cst_35 : f32 to vector<8x32xf32>
    %211 = arith.subf %210, %202 : vector<8x32xf32>
    %212 = arith.mulf %211, %209 : vector<8x32xf32>
    %213 = arith.mulf %202, %189 : vector<8x32xf32>
    %214 = arith.addf %212, %213 : vector<8x32xf32>
    %c0_36 = arith.constant 0 : index
    %c0_37 = arith.constant 0 : index
    %215 = vector.load %arg9[%c0_36, %c0_37] : memref<8x32xf32, #tpu.memory_space<vmem>>, vector<8x32xf32>
    tpu.vector_store %arg9[%c0_36, %c0_37], %214 {strides = array<i32>} : memref<8x32xf32, #tpu.memory_space<vmem>>, vector<8x32xf32>,
    %216 = tpu.concatenate %39, %64, %89, %114, %139, %164, %189, %214 in 0 : vector<8x32xf32>, vector<8x32xf32>, vector<8x32xf32>, vector<8x32xf32>, vector<8x32xf32>, vector<8x32xf32>, vector<8x32xf32>, vector<8x32xf32> -> vector<64x32xf32>
    %217 = arith.truncf %216 : vector<64x32xf32> to vector<64x32xbf16>
    %c0_38 = arith.constant 0 : index
    %c0_39 = arith.constant 0 : index
    %218 = vector.load %arg6[%c0_38, %c0_39] : memref<32x32xbf16, #tpu.memory_space<vmem>>, vector<32x32xbf16>
    %cst_40 = arith.constant dense<0.000000e+00> : vector<64x32xf32>
    %219 = tpu.matmul %217, %218, %cst_40 {dimension_numbers = #tpu.dot_dimension_numbers<[1], [0], [0], [1], [0, 0, 1, 1], [], []>} : vector<64x32xbf16>, vector<32x32xbf16>, vector<64x32xf32> -> vector<64x32xf32>
    %c0_41 = arith.constant 0 : index
    %c0_42 = arith.constant 0 : index
    %220 = vector.load %arg7[%c0_41, %c0_42] : memref<1x32xf32, #tpu.memory_space<vmem>>, vector<1x32xf32>
    %221 = vector.broadcast %220 : vector<1x32xf32> to vector<64x32xf32>
    %222 = arith.addf %219, %221 : vector<64x32xf32>
    %223 = vector.shape_cast %222 : vector<64x32xf32> to vector<8x8x32xf32>
    %c0_43 = arith.constant 0 : index
    %c0_44 = arith.constant 0 : index
    %c0_45 = arith.constant 0 : index
    %224 = vector.load %arg8[%c0_43, %c0_44, %c0_45] : memref<8x8x32xf32, #tpu.memory_space<vmem>>, vector<8x8x32xf32>
    tpu.vector_store %arg8[%c0_43, %c0_44, %c0_45], %223 {strides = array<i32>} : memref<8x8x32xf32, #tpu.memory_space<vmem>>, vector<8x8x32xf32>,
    return
  }
}

</mosaic_0001>

<llo_original>
// kernel: rnn_forward.1
$region0: #{rnn_forward.1}
  #allocation0 [shape = 'u32[]', space=smem, size = 0x4, offset = 0x4, fixed_abs, tag = 'smem constant byte address 0x4 - core index']
  #allocation1 [shape = 'u32[72,128]{1,0:T(1,128)}', space=vmem, size = 0x9000, scoped, tag = 'internal scratch']
  %s0 = inlined_call_operand.vmem [shape: bf16[8,8,32], index: 0, kind: input, shape index: {}]
  %s1 = inlined_call_operand.vmem [shape: f32[8,32], index: 1, kind: input, shape index: {}]
  %s2 = inlined_call_operand.vmem [shape: bf16[32,96], index: 2, kind: input, shape index: {}]
  %s3 = inlined_call_operand.vmem [shape: bf16[32,96], index: 3, kind: input, shape index: {}]
  %s4 = inlined_call_operand.vmem [shape: f32[1,96], index: 4, kind: input, shape index: {}]
  %s5 = inlined_call_operand.vmem [shape: f32[1,32], index: 5, kind: input, shape index: {}]
  %s6 = inlined_call_operand.vmem [shape: bf16[32,32], index: 6, kind: input, shape index: {}]
  %s7 = inlined_call_operand.vmem [shape: f32[1,32], index: 7, kind: input, shape index: {}]
  %s8 = inlined_call_operand.vmem [shape: f32[8,8,32], index: 8, kind: output, shape index: {0}]
  %s9 = inlined_call_operand.vmem [shape: f32[8,32], index: 9, kind: output, shape index: {1}]
  %10 = xla_tuple %s8, %s9
  %s11 = sld [smem:[#allocation0]]
  $region50: #{rnn_forward.1} parent=0
    _
  %s13 = ssub.s32 1, %s11
  %s14 = scalar_select 0, %s13, %s11
  // Predicated region
  $region2: #{rnn_forward.1} parent=0 // pred_check
    _
  $region3: #{rnn_forward.1} parent=0 // pred_check_branch
    %16 = sbr.rel (0) target = $region5
  $region4: #{rnn_forward.1} parent=0 // pred_region
    _
  $region5: #{rnn_forward.1} parent=0 // pred_fallthru
    _
  // Predicated region
  $region6: #{rnn_forward.1} parent=0 // pred_check
    _
  $region7: #{rnn_forward.1} parent=0 // pred_check_branch
    %18 = sbr.rel (0) target = $region9
  $region8: #{rnn_forward.1} parent=0 // pred_region
    _
  $region9: #{rnn_forward.1} parent=0 // pred_fallthru
    _
  // Predicated region
  $region10: #{rnn_forward.1} parent=0 // pred_check
    _
  $region11: #{rnn_forward.1} parent=0 // pred_check_branch
    %20 = sbr.rel (0) target = $region13
  $region12: #{rnn_forward.1} parent=0 // pred_region
    _
  $region13: #{rnn_forward.1} parent=0 // pred_fallthru
    _
  // Predicated region
  $region14: #{rnn_forward.1} parent=0 // pred_check
    _
  $region15: #{rnn_forward.1} parent=0 // pred_check_branch
    %22 = sbr.rel (0) target = $region17
  $region16: #{rnn_forward.1} parent=0 // pred_region
    _
  $region17: #{rnn_forward.1} parent=0 // pred_fallthru
    _
  // Predicated region
  $region18: #{rnn_forward.1} parent=0 // pred_check
    _
  $region19: #{rnn_forward.1} parent=0 // pred_check_branch
    %24 = sbr.rel (0) target = $region21
  $region20: #{rnn_forward.1} parent=0 // pred_region
    _
  $region21: #{rnn_forward.1} parent=0 // pred_fallthru
    _
  // Predicated region
  $region22: #{rnn_forward.1} parent=0 // pred_check
    _
  $region23: #{rnn_forward.1} parent=0 // pred_check_branch
    %26 = sbr.rel (0) target = $region25
  $region24: #{rnn_forward.1} parent=0 // pred_region
    _
  $region25: #{rnn_forward.1} parent=0 // pred_fallthru
    _
  // Predicated region
  $region26: #{rnn_forward.1} parent=0 // pred_check
    _
  $region27: #{rnn_forward.1} parent=0 // pred_check_branch
    %28 = sbr.rel (0) target = $region29
  $region28: #{rnn_forward.1} parent=0 // pred_region
    _
  $region29: #{rnn_forward.1} parent=0 // pred_fallthru
    _
  // Predicated region
  $region30: #{rnn_forward.1} parent=0 // pred_check
    _
  $region31: #{rnn_forward.1} parent=0 // pred_check_branch
    %30 = sbr.rel (0) target = $region33
  $region32: #{rnn_forward.1} parent=0 // pred_region
    _
  $region33: #{rnn_forward.1} parent=0 // pred_fallthru
    _
  %v32 = vld [vmem:[%s0] sm:$0xf]
  %v33 = vld [vmem:[%s0 + $0x4] sm:$0xf]
  %v34 = vld [vmem:[%s0 + $0x8] sm:$0xf]
  %v35 = vld [vmem:[%s0 + $0xc] sm:$0xf]
  %v36 = vld [vmem:[%s0 + $0x10] sm:$0xf]
  %v37 = vld [vmem:[%s0 + $0x14] sm:$0xf]
  %v38 = vld [vmem:[%s0 + $0x18] sm:$0xf]
  %v39 = vld [vmem:[%s0 + $0x1c] sm:$0xf]
  %v40 = vld [vmem:[%s2] sm:$0xf]
  %v41 = vld [vmem:[%s2 + $0x4] sm:$0xf]
  %v42 = vld [vmem:[%s2 + $0x8] sm:$0xf]
  %v43 = vld [vmem:[%s2 + $0xc] sm:$0xf]
  %v44 = vld [vmem:[%s4] sm:$0x1]
  %v46 = vperm.slane %v44, 0
  %v56 = vunpack.c.l.b16 %v32
  %v57 = vunpack.c.l.b16 %v33
  %v58 = vunpack.c.l.b16 %v34
  %v59 = vunpack.c.l.b16 %v35
  %v60 = vunpack.c.l.b16 %v36
  %v61 = vunpack.c.l.b16 %v37
  %v62 = vunpack.c.l.b16 %v38
  %v63 = vunpack.c.l.b16 %v39
  %v64 = vpack.c.b16 %v57, %v56
  %v65 = vpack.c.b16 %v59, %v58
  %v66 = vpack.c.b16 %v61, %v60
  %v67 = vpack.c.b16 %v63, %v62
  %v72 = vunpack.c.l.b16 %v40
  %v73 = vunpack.c.l.b16 %v41
  %v74 = vunpack.c.l.b16 %v42
  %v75 = vunpack.c.l.b16 %v43
  %v76 = vpack.c.b16 %v73, %v72
  %v77 = vpack.c.b16 %v75, %v74
  %vm80 = vcmask 261120
  %v82 = vsel %vm80, %v64, 0
  %v85 = vsel %vm80, %v65, 0
  %v88 = vsel %vm80, %v66, 0
  %v91 = vsel %vm80, %v67, 0
  %93 = vmatpush.bf16.msra.mxu0 0
  %94 = vmatpush.bf16.msra.mxu0 0
  %95 = vmatpush.bf16.msra.mxu0 0
  %96 = vmatpush.bf16.msra.mxu0 0
  %97 = vmatpush.bf16.msra.mxu0 0
  %98 = vmatpush.bf16.msra.mxu0 0
  %99 = vmatpush.bf16.msra.mxu0 %v77
  %100 = vmatpush.bf16.msra.mxu0 %v76
  %101 = vmatmul.bf16.gmra.mxu0 %v82
  %v102 = vpop.f32.mrf.mxu0
  %v103 = vadd.f32 %v46, %v102
  %v104 = vpop.f32.mrf.mxu0
  %v105 = vadd.f32 %v46, %v104
  %106 = vmatmul.bf16.gmra.mxu0 %v85
  %v107 = vpop.f32.mrf.mxu0
  %v108 = vadd.f32 %v46, %v107
  %v109 = vpop.f32.mrf.mxu0
  %v110 = vadd.f32 %v46, %v109
  %111 = vmatmul.bf16.gmra.mxu0 %v88
  %v112 = vpop.f32.mrf.mxu0
  %v113 = vadd.f32 %v46, %v112
  %v114 = vpop.f32.mrf.mxu0
  %v115 = vadd.f32 %v46, %v114
  %116 = vmatmul.bf16.gmra.mxu0 %v91
  %v117 = vpop.f32.mrf.mxu0
  %v118 = vadd.f32 %v46, %v117
  %v119 = vpop.f32.mrf.mxu0
  %v120 = vadd.f32 %v46, %v119
  %121 = vdwg.mxu0
  %v122 = vld [vmem:[%s3] sm:$0xf]
  %v123 = vld [vmem:[%s3 + $0x4] sm:$0xf]
  %v124 = vld [vmem:[%s3 + $0x8] sm:$0xf]
  %v125 = vld [vmem:[%s3 + $0xc] sm:$0xf]
  %v126 = vld [vmem:[%s5] sm:$0x1]
  %v128 = vperm.slane %v126, 0
  %v129 = vld [vmem:[%s1] sm:$0xff]
  %v130 = vpack.c.bf16 %v129, %v129
  %v135 = vunpack.c.l.b16 %v122
  %v136 = vunpack.c.l.b16 %v123
  %v137 = vunpack.c.l.b16 %v124
  %v138 = vunpack.c.l.b16 %v125
  %v139 = vpack.c.b16 %v136, %v135
  %v140 = vpack.c.b16 %v138, %v137
  %v144 = vsel %vm80, %v130, 0
  %146 = vmatpush.bf16.msra.mxu0 0
  %147 = vmatpush.bf16.msra.mxu0 0
  %148 = vmatpush.bf16.msra.mxu0 0
  %149 = vmatpush.bf16.msra.mxu0 0
  %150 = vmatpush.bf16.msra.mxu0 0
  %151 = vmatpush.bf16.msra.mxu0 0
  %152 = vmatpush.bf16.msra.mxu0 %v140
  %153 = vmatpush.bf16.msra.mxu0 %v139
  %154 = vmatmul.bf16.gmra.mxu0 %v144
  %v155 = vpop.f32.mrf.mxu0
  %v156 = vadd.f32 0.0, %v155
  %v157 = vpop.f32.mrf.mxu0
  %158 = vdwg.mxu0
  %v159 = vadd.f32 %v103, %v156
  %v160 = vxor.u32 %v159, 2147483648
  %v161 = vmul.f32 %v160, 1.442695
  %v162 = vpow.pop %v161
  %v163 = vadd.f32 %v162, 1.0
  %v164 = vrcp.pop %v163
  %v165 = vmul.f32 %v163, %v164
  %v166 = vsub.f32 1.0, %v165
  %v167 = vmul.f32 %v164, %v166
  %v168 = vadd.f32 %v164, %v167
  %vm169 = vweird.f32 %v163
  %vm170 = vweird.f32 %v164
  %vm171 = vmor %vm169, %vm170
  %v172 = vsel %vm171, %v164, %v168
  %v173 = vand.u32 2147483647, %v163
  %vm174 = vcmp.eq.f32.partialorder %v173, 8.507059e+37
  %v175 = vand.u32 %v163, 2147483648
  %v176 = vor.u32 1.1754944e-38, %v175
  %v177 = vsel %vm174, %v176, %v172
  %v178 = vmul.f32 1.0, %v177
  %179 = vrot.lane.b32.xlu0 %v128, 64
  %v180 = vpop.permute.xlu0 %179
  %v182 = vadd.f32 %v156, %v180
  %184 = vrot.lane.b32.xlu0 %v182, 64
  %v185 = vpop.permute.xlu0 %184
  %v187 = vmul.f32 %v178, %v185
  %189 = vrot.lane.b32.xlu0 %v187, 64
  %v190 = vpop.permute.xlu0 %189
  %v192 = vadd.f32 %v103, %v190
  %v193 = vtanh.pop %v192
  %v194 = vsub.f32 1.0, %v178
  %196 = vrot.lane.b32.xlu0 %v193, 96
  %v197 = vpop.permute.xlu0 %196
  %v199 = vmul.f32 %v194, %v197
  %201 = vrot.lane.b32.xlu0 %v129, 32
  %v202 = vpop.permute.xlu0 %201
  %v204 = vmul.f32 %v178, %v202
  %v205 = vadd.f32 %v199, %v204
  %v206 = vpack.c.bf16 %v205, %v205
  %208 = vrot.lane.b32.xlu0 %v206, 96
  %v209 = vpop.permute.xlu0 %208
  %v211 = vsel %vm80, %v209, 0
  %213 = vmatpush.bf16.msra.mxu0 0
  %214 = vmatpush.bf16.msra.mxu0 0
  %215 = vmatpush.bf16.msra.mxu0 0
  %216 = vmatpush.bf16.msra.mxu0 0
  %217 = vmatpush.bf16.msra.mxu0 0
  %218 = vmatpush.bf16.msra.mxu0 0
  %219 = vmatpush.bf16.msra.mxu0 %v140
  %220 = vmatpush.bf16.msra.mxu0 %v139
  %221 = vmatmul.bf16.gmra.mxu0 %v211
  %v222 = vpop.f32.mrf.mxu0
  %v223 = vadd.f32 0.0, %v222
  %v224 = vpop.f32.mrf.mxu0
  %225 = vdwg.mxu0
  %v226 = vadd.f32 %v105, %v223
  %v227 = vxor.u32 %v226, 2147483648
  %v228 = vmul.f32 %v227, 1.442695
  %v229 = vpow.pop %v228
  %v230 = vadd.f32 %v229, 1.0
  %v231 = vrcp.pop %v230
  %v232 = vmul.f32 %v230, %v231
  %v233 = vsub.f32 1.0, %v232
  %v234 = vmul.f32 %v231, %v233
  %v235 = vadd.f32 %v231, %v234
  %vm236 = vweird.f32 %v230
  %vm237 = vweird.f32 %v231
  %vm238 = vmor %vm236, %vm237
  %v239 = vsel %vm238, %v231, %v235
  %v240 = vand.u32 2147483647, %v230
  %vm241 = vcmp.eq.f32.partialorder %v240, 8.507059e+37
  %v242 = vand.u32 %v230, 2147483648
  %v243 = vor.u32 1.1754944e-38, %v242
  %v244 = vsel %vm241, %v243, %v239
  %v245 = vmul.f32 1.0, %v244
  %v246 = vadd.f32 %v223, %v180
  %248 = vrot.lane.b32.xlu0 %v246, 64
  %v249 = vpop.permute.xlu0 %248
  %v251 = vmul.f32 %v245, %v249
  %253 = vrot.lane.b32.xlu0 %v251, 64
  %v254 = vpop.permute.xlu0 %253
  %v256 = vadd.f32 %v105, %v254
  %v257 = vtanh.pop %v256
  %v258 = vsub.f32 1.0, %v245
  %260 = vrot.lane.b32.xlu0 %v257, 96
  %v261 = vpop.permute.xlu0 %260
  %v263 = vmul.f32 %v258, %v261
  %v264 = vmul.f32 %v245, %v205
  %v265 = vadd.f32 %v263, %v264
  %v266 = vpack.c.bf16 %v265, %v265
  %268 = vrot.lane.b32.xlu0 %v266, 96
  %v269 = vpop.permute.xlu0 %268
  %v271 = vsel %vm80, %v269, 0
  %273 = vmatpush.bf16.msra.mxu0 0
  %274 = vmatpush.bf16.msra.mxu0 0
  %275 = vmatpush.bf16.msra.mxu0 0
  %276 = vmatpush.bf16.msra.mxu0 0
  %277 = vmatpush.bf16.msra.mxu0 0
  %278 = vmatpush.bf16.msra.mxu0 0
  %279 = vmatpush.bf16.msra.mxu0 %v140
  %280 = vmatpush.bf16.msra.mxu0 %v139
  %281 = vmatmul.bf16.gmra.mxu0 %v271
  %v282 = vpop.f32.mrf.mxu0
  %v283 = vadd.f32 0.0, %v282
  %v284 = vpop.f32.mrf.mxu0
  %285 = vdwg.mxu0
  %v286 = vadd.f32 %v108, %v283
  %v287 = vxor.u32 %v286, 2147483648
  %v288 = vmul.f32 %v287, 1.442695
  %v289 = vpow.pop %v288
  %v290 = vadd.f32 %v289, 1.0
  %v291 = vrcp.pop %v290
  %v292 = vmul.f32 %v290, %v291
  %v293 = vsub.f32 1.0, %v292
  %v294 = vmul.f32 %v291, %v293
  %v295 = vadd.f32 %v291, %v294
  %vm296 = vweird.f32 %v290
  %vm297 = vweird.f32 %v291
  %vm298 = vmor %vm296, %vm297
  %v299 = vsel %vm298, %v291, %v295
  %v300 = vand.u32 2147483647, %v290
  %vm301 = vcmp.eq.f32.partialorder %v300, 8.507059e+37
  %v302 = vand.u32 %v290, 2147483648
  %v303 = vor.u32 1.1754944e-38, %v302
  %v304 = vsel %vm301, %v303, %v299
  %v305 = vmul.f32 1.0, %v304
  %v306 = vadd.f32 %v283, %v180
  %308 = vrot.lane.b32.xlu0 %v306, 64
  %v309 = vpop.permute.xlu0 %308
  %v311 = vmul.f32 %v305, %v309
  %313 = vrot.lane.b32.xlu0 %v311, 64
  %v314 = vpop.permute.xlu0 %313
  %v316 = vadd.f32 %v108, %v314
  %v317 = vtanh.pop %v316
  %v318 = vsub.f32 1.0, %v305
  %320 = vrot.lane.b32.xlu0 %v317, 96
  %v321 = vpop.permute.xlu0 %320
  %v323 = vmul.f32 %v318, %v321
  %v324 = vmul.f32 %v305, %v265
  %v325 = vadd.f32 %v323, %v324
  %v326 = vpack.c.bf16 %v325, %v325
  %328 = vrot.lane.b32.xlu0 %v326, 96
  %v329 = vpop.permute.xlu0 %328
  %v331 = vsel %vm80, %v329, 0
  %333 = vmatpush.bf16.msra.mxu0 0
  %334 = vmatpush.bf16.msra.mxu0 0
  %335 = vmatpush.bf16.msra.mxu0 0
  %336 = vmatpush.bf16.msra.mxu0 0
  %337 = vmatpush.bf16.msra.mxu0 0
  %338 = vmatpush.bf16.msra.mxu0 0
  %339 = vmatpush.bf16.msra.mxu0 %v140
  %340 = vmatpush.bf16.msra.mxu0 %v139
  %341 = vmatmul.bf16.gmra.mxu0 %v331
  %v342 = vpop.f32.mrf.mxu0
  %v343 = vadd.f32 0.0, %v342
  %v344 = vpop.f32.mrf.mxu0
  %345 = vdwg.mxu0
  %v346 = vadd.f32 %v110, %v343
  %v347 = vxor.u32 %v346, 2147483648
  %v348 = vmul.f32 %v347, 1.442695
  %v349 = vpow.pop %v348
  %v350 = vadd.f32 %v349, 1.0
  %v351 = vrcp.pop %v350
  %v352 = vmul.f32 %v350, %v351
  %v353 = vsub.f32 1.0, %v352
  %v354 = vmul.f32 %v351, %v353
  %v355 = vadd.f32 %v351, %v354
  %vm356 = vweird.f32 %v350
  %vm357 = vweird.f32 %v351
  %vm358 = vmor %vm356, %vm357
  %v359 = vsel %vm358, %v351, %v355
  %v360 = vand.u32 2147483647, %v350
  %vm361 = vcmp.eq.f32.partialorder %v360, 8.507059e+37
  %v362 = vand.u32 %v350, 2147483648
  %v363 = vor.u32 1.1754944e-38, %v362
  %v364 = vsel %vm361, %v363, %v359
  %v365 = vmul.f32 1.0, %v364
  %v366 = vadd.f32 %v343, %v180
  %368 = vrot.lane.b32.xlu0 %v366, 64
  %v369 = vpop.permute.xlu0 %368
  %v371 = vmul.f32 %v365, %v369
  %373 = vrot.lane.b32.xlu0 %v371, 64
  %v374 = vpop.permute.xlu0 %373
  %v376 = vadd.f32 %v110, %v374
  %v377 = vtanh.pop %v376
  %v378 = vsub.f32 1.0, %v365
  %380 = vrot.lane.b32.xlu0 %v377, 96
  %v381 = vpop.permute.xlu0 %380
  %v383 = vmul.f32 %v378, %v381
  %v384 = vmul.f32 %v365, %v325
  %v385 = vadd.f32 %v383, %v384
  %v386 = vpack.c.bf16 %v385, %v385
  %388 = vrot.lane.b32.xlu0 %v386, 96
  %v389 = vpop.permute.xlu0 %388
  %v391 = vsel %vm80, %v389, 0
  %393 = vmatpush.bf16.msra.mxu0 0
  %394 = vmatpush.bf16.msra.mxu0 0
  %395 = vmatpush.bf16.msra.mxu0 0
  %396 = vmatpush.bf16.msra.mxu0 0
  %397 = vmatpush.bf16.msra.mxu0 0
  %398 = vmatpush.bf16.msra.mxu0 0
  %399 = vmatpush.bf16.msra.mxu0 %v140
  %400 = vmatpush.bf16.msra.mxu0 %v139
  %401 = vmatmul.bf16.gmra.mxu0 %v391
  %v402 = vpop.f32.mrf.mxu0
  %v403 = vadd.f32 0.0, %v402
  %v404 = vpop.f32.mrf.mxu0
  %405 = vdwg.mxu0
  %v406 = vadd.f32 %v113, %v403
  %v407 = vxor.u32 %v406, 2147483648
  %v408 = vmul.f32 %v407, 1.442695
  %v409 = vpow.pop %v408
  %v410 = vadd.f32 %v409, 1.0
  %v411 = vrcp.pop %v410
  %v412 = vmul.f32 %v410, %v411
  %v413 = vsub.f32 1.0, %v412
  %v414 = vmul.f32 %v411, %v413
  %v415 = vadd.f32 %v411, %v414
  %vm416 = vweird.f32 %v410
  %vm417 = vweird.f32 %v411
  %vm418 = vmor %vm416, %vm417
  %v419 = vsel %vm418, %v411, %v415
  %v420 = vand.u32 2147483647, %v410
  %vm421 = vcmp.eq.f32.partialorder %v420, 8.507059e+37
  %v422 = vand.u32 %v410, 2147483648
  %v423 = vor.u32 1.1754944e-38, %v422
  %v424 = vsel %vm421, %v423, %v419
  %v425 = vmul.f32 1.0, %v424
  %v426 = vadd.f32 %v403, %v180
  %428 = vrot.lane.b32.xlu0 %v426, 64
  %v429 = vpop.permute.xlu0 %428
  %v431 = vmul.f32 %v425, %v429
  %433 = vrot.lane.b32.xlu0 %v431, 64
  %v434 = vpop.permute.xlu0 %433
  %v436 = vadd.f32 %v113, %v434
  %v437 = vtanh.pop %v436
  %v438 = vsub.f32 1.0, %v425
  %440 = vrot.lane.b32.xlu0 %v437, 96
  %v441 = vpop.permute.xlu0 %440
  %v443 = vmul.f32 %v438, %v441
  %v444 = vmul.f32 %v425, %v385
  %v445 = vadd.f32 %v443, %v444
  %v446 = vpack.c.bf16 %v445, %v445
  %448 = vrot.lane.b32.xlu0 %v446, 96
  %v449 = vpop.permute.xlu0 %448
  %v451 = vsel %vm80, %v449, 0
  %453 = vmatpush.bf16.msra.mxu0 0
  %454 = vmatpush.bf16.msra.mxu0 0
  %455 = vmatpush.bf16.msra.mxu0 0
  %456 = vmatpush.bf16.msra.mxu0 0
  %457 = vmatpush.bf16.msra.mxu0 0
  %458 = vmatpush.bf16.msra.mxu0 0
  %459 = vmatpush.bf16.msra.mxu0 %v140
  %460 = vmatpush.bf16.msra.mxu0 %v139
  %461 = vmatmul.bf16.gmra.mxu0 %v451
  %v462 = vpop.f32.mrf.mxu0
  %v463 = vadd.f32 0.0, %v462
  %v464 = vpop.f32.mrf.mxu0
  %465 = vdwg.mxu0
  %v466 = vadd.f32 %v115, %v463
  %v467 = vxor.u32 %v466, 2147483648
  %v468 = vmul.f32 %v467, 1.442695
  %v469 = vpow.pop %v468
  %v470 = vadd.f32 %v469, 1.0
  %v471 = vrcp.pop %v470
  %v472 = vmul.f32 %v470, %v471
  %v473 = vsub.f32 1.0, %v472
  %v474 = vmul.f32 %v471, %v473
  %v475 = vadd.f32 %v471, %v474
  %vm476 = vweird.f32 %v470
  %vm477 = vweird.f32 %v471
  %vm478 = vmor %vm476, %vm477
  %v479 = vsel %vm478, %v471, %v475
  %v480 = vand.u32 2147483647, %v470
  %vm481 = vcmp.eq.f32.partialorder %v480, 8.507059e+37
  %v482 = vand.u32 %v470, 2147483648
  %v483 = vor.u32 1.1754944e-38, %v482
  %v484 = vsel %vm481, %v483, %v479
  %v485 = vmul.f32 1.0, %v484
  %v486 = vadd.f32 %v463, %v180
  %488 = vrot.lane.b32.xlu0 %v486, 64
  %v489 = vpop.permute.xlu0 %488
  %v491 = vmul.f32 %v485, %v489
  %493 = vrot.lane.b32.xlu0 %v491, 64
  %v494 = vpop.permute.xlu0 %493
  %v496 = vadd.f32 %v115, %v494
  %v497 = vtanh.pop %v496
  %v498 = vsub.f32 1.0, %v485
  %500 = vrot.lane.b32.xlu0 %v497, 96
  %v501 = vpop.permute.xlu0 %500
  %v503 = vmul.f32 %v498, %v501
  %v504 = vmul.f32 %v485, %v445
  %v505 = vadd.f32 %v503, %v504
  %v506 = vpack.c.bf16 %v505, %v505
  %508 = vrot.lane.b32.xlu0 %v506, 96
  %v509 = vpop.permute.xlu0 %508
  %v511 = vsel %vm80, %v509, 0
  %513 = vmatpush.bf16.msra.mxu0 0
  %514 = vmatpush.bf16.msra.mxu0 0
  %515 = vmatpush.bf16.msra.mxu0 0
  %516 = vmatpush.bf16.msra.mxu0 0
  %517 = vmatpush.bf16.msra.mxu0 0
  %518 = vmatpush.bf16.msra.mxu0 0
  %519 = vmatpush.bf16.msra.mxu0 %v140
  %520 = vmatpush.bf16.msra.mxu0 %v139
  %521 = vmatmul.bf16.gmra.mxu0 %v511
  %v522 = vpop.f32.mrf.mxu0
  %v523 = vadd.f32 0.0, %v522
  %v524 = vpop.f32.mrf.mxu0
  %525 = vdwg.mxu0
  %v526 = vadd.f32 %v118, %v523
  %v527 = vxor.u32 %v526, 2147483648
  %v528 = vmul.f32 %v527, 1.442695
  %v529 = vpow.pop %v528
  %v530 = vadd.f32 %v529, 1.0
  %v531 = vrcp.pop %v530
  %v532 = vmul.f32 %v530, %v531
  %v533 = vsub.f32 1.0, %v532
  %v534 = vmul.f32 %v531, %v533
  %v535 = vadd.f32 %v531, %v534
  %vm536 = vweird.f32 %v530
  %vm537 = vweird.f32 %v531
  %vm538 = vmor %vm536, %vm537
  %v539 = vsel %vm538, %v531, %v535
  %v540 = vand.u32 2147483647, %v530
  %vm541 = vcmp.eq.f32.partialorder %v540, 8.507059e+37
  %v542 = vand.u32 %v530, 2147483648
  %v543 = vor.u32 1.1754944e-38, %v542
  %v544 = vsel %vm541, %v543, %v539
  %v545 = vmul.f32 1.0, %v544
  %v546 = vadd.f32 %v523, %v180
  %548 = vrot.lane.b32.xlu0 %v546, 64
  %v549 = vpop.permute.xlu0 %548
  %v551 = vmul.f32 %v545, %v549
  %553 = vrot.lane.b32.xlu0 %v551, 64
  %v554 = vpop.permute.xlu0 %553
  %v556 = vadd.f32 %v118, %v554
  %v557 = vtanh.pop %v556
  %v558 = vsub.f32 1.0, %v545
  %560 = vrot.lane.b32.xlu0 %v557, 96
  %v561 = vpop.permute.xlu0 %560
  %v563 = vmul.f32 %v558, %v561
  %v564 = vmul.f32 %v545, %v505
  %v565 = vadd.f32 %v563, %v564
  %v566 = vpack.c.bf16 %v565, %v565
  %568 = vrot.lane.b32.xlu0 %v566, 96
  %v569 = vpop.permute.xlu0 %568
  %v571 = vsel %vm80, %v569, 0
  %573 = vmatpush.bf16.msra.mxu0 0
  %574 = vmatpush.bf16.msra.mxu0 0
  %575 = vmatpush.bf16.msra.mxu0 0
  %576 = vmatpush.bf16.msra.mxu0 0
  %577 = vmatpush.bf16.msra.mxu0 0
  %578 = vmatpush.bf16.msra.mxu0 0
  %579 = vmatpush.bf16.msra.mxu0 %v140
  %580 = vmatpush.bf16.msra.mxu0 %v139
  %581 = vmatmul.bf16.gmra.mxu0 %v571
  %v582 = vpop.f32.mrf.mxu0
  %v583 = vadd.f32 0.0, %v582
  %v584 = vpop.f32.mrf.mxu0
  %585 = vdwg.mxu0
  %v586 = vadd.f32 %v120, %v583
  %v587 = vxor.u32 %v586, 2147483648
  %v588 = vmul.f32 %v587, 1.442695
  %v589 = vpow.pop %v588
  %v590 = vadd.f32 %v589, 1.0
  %v591 = vrcp.pop %v590
  %v592 = vmul.f32 %v590, %v591
  %v593 = vsub.f32 1.0, %v592
  %v594 = vmul.f32 %v591, %v593
  %v595 = vadd.f32 %v591, %v594
  %vm596 = vweird.f32 %v590
  %vm597 = vweird.f32 %v591
  %vm598 = vmor %vm596, %vm597
  %v599 = vsel %vm598, %v591, %v595
  %v600 = vand.u32 2147483647, %v590
  %vm601 = vcmp.eq.f32.partialorder %v600, 8.507059e+37
  %v602 = vand.u32 %v590, 2147483648
  %v603 = vor.u32 1.1754944e-38, %v602
  %v604 = vsel %vm601, %v603, %v599
  %v605 = vmul.f32 1.0, %v604
  %v606 = vadd.f32 %v583, %v180
  %608 = vrot.lane.b32.xlu0 %v606, 64
  %v609 = vpop.permute.xlu0 %608
  %v611 = vmul.f32 %v605, %v609
  %613 = vrot.lane.b32.xlu0 %v611, 64
  %v614 = vpop.permute.xlu0 %613
  %v616 = vadd.f32 %v120, %v614
  %v617 = vtanh.pop %v616
  %v618 = vsub.f32 1.0, %v605
  %620 = vrot.lane.b32.xlu0 %v617, 96
  %v621 = vpop.permute.xlu0 %620
  %v623 = vmul.f32 %v618, %v621
  %v624 = vmul.f32 %v605, %v565
  %v625 = vadd.f32 %v623, %v624
  %627 = vrot.lane.b32.xlu0 %v625, 96
  %v628 = vpop.permute.xlu0 %627
  %630 = vst.msk [vmem:[%s9] sm:$0xff] %vm80, %v628
  %v631 = vpack.c.bf16 %v265, %v205
  %v632 = vpack.c.bf16 %v385, %v325
  %v633 = vpack.c.bf16 %v505, %v445
  %v634 = vpack.c.bf16 %v625, %v565
  %v635 = vld [vmem:[%s6] sm:$0xf]
  %v636 = vld [vmem:[%s6 + $0x4] sm:$0xf]
  %v637 = vld [vmem:[%s6 + $0x8] sm:$0xf]
  %v638 = vld [vmem:[%s6 + $0xc] sm:$0xf]
  %v639 = vld [vmem:[%s7] sm:$0x1]
  %v641 = vperm.slane %v639, 0
  %647 = vrot.lane.b32.xlu0 %v631, 96
  %v648 = vpop.permute.xlu0 %647
  %649 = vrot.lane.b32.xlu0 %v632, 96
  %v650 = vpop.permute.xlu0 %649
  %651 = vrot.lane.b32.xlu0 %v633, 96
  %v652 = vpop.permute.xlu0 %651
  %653 = vrot.lane.b32.xlu0 %v634, 96
  %v654 = vpop.permute.xlu0 %653
  %v659 = vunpack.c.l.b16 %v635
  %v660 = vunpack.c.l.b16 %v636
  %v661 = vunpack.c.l.b16 %v637
  %v662 = vunpack.c.l.b16 %v638
  %v663 = vpack.c.b16 %v660, %v659
  %v664 = vpack.c.b16 %v662, %v661
  %v668 = vsel %vm80, %v648, 0
  %v671 = vsel %vm80, %v650, 0
  %v674 = vsel %vm80, %v652, 0
  %v677 = vsel %vm80, %v654, 0
  %679 = vmatpush.bf16.msra.mxu0 0
  %680 = vmatpush.bf16.msra.mxu0 0
  %681 = vmatpush.bf16.msra.mxu0 0
  %682 = vmatpush.bf16.msra.mxu0 0
  %683 = vmatpush.bf16.msra.mxu0 0
  %684 = vmatpush.bf16.msra.mxu0 0
  %685 = vmatpush.bf16.msra.mxu0 %v664
  %686 = vmatpush.bf16.msra.mxu0 %v663
  %687 = vmatmul.bf16.gmra.mxu0 %v668
  %v688 = vpop.f32.mrf.mxu0
  %v689 = vadd.f32 %v641, %v688
  %v690 = vpop.f32.mrf.mxu0
  %v691 = vadd.f32 %v641, %v690
  %692 = vmatmul.bf16.gmra.mxu0 %v671
  %v693 = vpop.f32.mrf.mxu0
  %v694 = vadd.f32 %v641, %v693
  %v695 = vpop.f32.mrf.mxu0
  %v696 = vadd.f32 %v641, %v695
  %697 = vmatmul.bf16.gmra.mxu0 %v674
  %v698 = vpop.f32.mrf.mxu0
  %v699 = vadd.f32 %v641, %v698
  %v700 = vpop.f32.mrf.mxu0
  %v701 = vadd.f32 %v641, %v700
  %702 = vmatmul.bf16.gmra.mxu0 %v677
  %v703 = vpop.f32.mrf.mxu0
  %v704 = vadd.f32 %v641, %v703
  %v705 = vpop.f32.mrf.mxu0
  %v706 = vadd.f32 %v641, %v705
  %707 = vdwg.mxu0
  %708 = vst.msk [vmem:[%s8] sm:$0xff] %vm80, %v689
  %709 = vst.msk [vmem:[%s8 + $0x8] sm:$0xff] %vm80, %v691
  %710 = vst.msk [vmem:[%s8 + $0x10] sm:$0xff] %vm80, %v694
  %711 = vst.msk [vmem:[%s8 + $0x18] sm:$0xff] %vm80, %v696
  %712 = vst.msk [vmem:[%s8 + $0x20] sm:$0xff] %vm80, %v699
  %713 = vst.msk [vmem:[%s8 + $0x28] sm:$0xff] %vm80, %v701
  %714 = vst.msk [vmem:[%s8 + $0x30] sm:$0xff] %vm80, %v704
  %715 = vst.msk [vmem:[%s8 + $0x38] sm:$0xff] %vm80, %v706
  // Predicated region
  $region34: #{rnn_forward.1} parent=0 // pred_check
    _
  $region35: #{rnn_forward.1} parent=0 // pred_check_branch
    %717 = sbr.rel (0) target = $region37
  $region36: #{rnn_forward.1} parent=0 // pred_region
    _
  $region37: #{rnn_forward.1} parent=0 // pred_fallthru
    _
  // Predicated region
  $region38: #{rnn_forward.1} parent=0 // pred_check
    _
  $region39: #{rnn_forward.1} parent=0 // pred_check_branch
    %719 = sbr.rel (0) target = $region41
  $region40: #{rnn_forward.1} parent=0 // pred_region
    _
  $region41: #{rnn_forward.1} parent=0 // pred_fallthru
    _
  // Predicated region
  $region42: #{rnn_forward.1} parent=0 // pred_check
    _
  $region43: #{rnn_forward.1} parent=0 // pred_check_branch
    %721 = sbr.rel (0) target = $region45
  $region44: #{rnn_forward.1} parent=0 // pred_region
    _
  $region45: #{rnn_forward.1} parent=0 // pred_fallthru
    _
  // Predicated region
  $region46: #{rnn_forward.1} parent=0 // pred_check
    _
  $region47: #{rnn_forward.1} parent=0 // pred_check_branch
    %723 = sbr.rel (0) target = $region49
  $region48: #{rnn_forward.1} parent=0 // pred_region
    _
  $region49: #{rnn_forward.1} parent=0 // pred_fallthru
    _

</llo_original>
